<compile_context>
chip_gen: v5e
topology: v5e:2x2
jax: 0.10.0
libtpu: 0.0.40
codegen_flags: <defaults>
</compile_context>

<pallas_src>
import functools

import jax
import jax.numpy as jnp
from jax.experimental import pallas as pl
from jax.experimental.pallas import tpu as pltpu

NEG_SLOPE = 0.01  # F.leaky_relu default negative_slope


def _round_up(x, m):
    return ((x + m - 1) // m) * m


def _leaky_relu(x):
    return jnp.where(x > 0, x, NEG_SLOPE * x)


def creative_net_kernel(x_ref, ws_ref, bs_ref,
                        w1_ref, b1_ref, w2_ref, b2_ref, w3_ref, b3_ref,
                        out_ref, psum_ref, *, hw, hwb, num_k):
    """Grid = (batch tiles, HW chunks).

    Per step: stream one (Nb, C, HWb) image tile and fold its 128-lane groups
    into a per-channel (Nb, C, 128) f32 VMEM partial (pure VPU adds, no XLU,
    no lane scatter).  On the last chunk of a batch tile: one cross-lane
    reduce -> GAP means -> bf16 stub projection -> fc1/fc2/fc3 MLP head ->
    sigmoid, all on the MXU with f32 accumulation.
    """
    k = pl.program_id(1)
    nb, c, g = psum_ref.shape                     # g = min(128, HW)
    m = hwb // g                                  # lane groups per full chunk

    @pl.when(k == 0)
    def _init():
        psum_ref[...] = jnp.zeros_like(psum_ref)

    def fold(width):
        # Sum the first `width` (Python-static) valid lanes of this tile,
        # 128-lane-group-wise.  Masks are compile-time constants.
        part = jnp.zeros((nb, c, g), jnp.float32)
        for j in range(m):
            off = j * g
            if off >= width:                      # group fully out of range
                break
            grp = x_ref[:, :, off:off + g].astype(jnp.float32)
            if off + g > width:                   # ragged group: drop garbage lanes
                lane = jax.lax.broadcasted_iota(jnp.int32, (1, 1, g), 2)
                grp = jnp.where(lane < (width - off), grp, 0.0)
            part = part + grp
        return part

    if hw % hwb == 0:                             # every chunk is full
        psum_ref[...] += fold(hwb)
    else:                                         # only the last chunk is ragged
        last = num_k - 1

        @pl.when(k != last)
        def _full():
            psum_ref[...] += fold(hwb)

        @pl.when(k == last)
        def _tail():
            psum_ref[...] += fold(hw - last * hwb)

    # ---- MLP head: once per batch tile, after the reduction finishes --------
    @pl.when(k == num_k - 1)
    def _head():
        # GAP: single cross-lane reduce per batch tile; 1/(H*W) applied here.
        chsum = jnp.sum(psum_ref[...], axis=-1) * (1.0 / hw)          # (Nb, C)
        # Backbone stub: Linear(C -> 1000) on the channel means (bf16 MXU).
        feat = jnp.dot(chsum.astype(ws_ref.dtype), ws_ref[...],
                       preferred_element_type=jnp.float32) + bs_ref[...]
        # fc1 + leaky_relu   (dropout1 = eval-mode identity)
        h = _leaky_relu(jnp.dot(feat.astype(w1_ref.dtype), w1_ref[...],
                                preferred_element_type=jnp.float32) + b1_ref[...])
        # fc2 + leaky_relu   (dropout2 = eval-mode identity)
        h = _leaky_relu(jnp.dot(h.astype(w2_ref.dtype), w2_ref[...],
                                preferred_element_type=jnp.float32) + b2_ref[...])
        # fc3 + leaky_relu + sigmoid  (lane-dense padded cols sliced in wrapper)
        h = _leaky_relu(jnp.dot(h.astype(w3_ref.dtype), w3_ref[...],
                                preferred_element_type=jnp.float32) + b3_ref[...])
        out_ref[...] = jax.nn.sigmoid(h)


def init_params(key, in_channels=3, feat_dim=1000, num_output_classes=2,
                h1=128, h2=32):
    """Synthetic parameters with CreativeNet.__init__ shapes.  Head dims are
    zero-padded to multiples of 128 (lane-dense); all matmul weights in bf16,
    biases in f32."""
    FEAT = _round_up(feat_dim, 128)               # 1000 -> 1024
    H1 = _round_up(h1, 128)                       # 128
    H2 = _round_up(h2, 128)                       # 32  -> 128
    OUT = _round_up(num_output_classes, 128)      # 2   -> 128
    ks = jax.random.split(key, 8)

    def linear(kw, kb, fan_in, fan_out, rows, cols):
        s = 1.0 / (fan_in ** 0.5)
        w = jax.random.uniform(kw, (fan_in, fan_out), jnp.float32, -s, s)
        b = jax.random.uniform(kb, (1, fan_out), jnp.float32, -s, s)
        w = jnp.pad(w, ((0, rows - fan_in), (0, cols - fan_out))).astype(jnp.bfloat16)
        b = jnp.pad(b, ((0, 0), (0, cols - fan_out)))             # f32 bias
        return w, b

    ws, bs = linear(ks[0], ks[1], in_channels, feat_dim, in_channels, FEAT)  # stub
    w1, b1 = linear(ks[2], ks[3], feat_dim, h1, FEAT, H1)                    # fc1
    w2, b2 = linear(ks[4], ks[5], h1, h2, H1, H2)                            # fc2
    w3, b3 = linear(ks[6], ks[7], h2, num_output_classes, H2, OUT)           # fc3
    return dict(ws=ws, bs=bs, w1=w1, b1=b1, w2=w2, b2=b2, w3=w3, b3=b3,
                num_classes=num_output_classes)


def creative_net_forward(x_nchw, params):
    N, C, H, W = x_nchw.shape
    HW = H * W
    itemsize = jnp.dtype(x_nchw.dtype).itemsize

    Cw, FEAT = params["ws"].shape
    H1 = params["w1"].shape[1]
    H2 = params["w2"].shape[1]
    OUT = params["w3"].shape[1]
    num_classes = params["num_classes"]
    assert Cw == C, (Cw, C)

    # Free reshape: image stays in HBM in its native dtype -- no pad, no copy.
    x3 = x_nchw.reshape(N, C, HW)

    # Batch tile (leading, non-tiled dim of the block -> no (8,128) constraint).
    Nb = min(128, N)
    num_b = pl.cdiv(N, Nb)

    # HW chunk sizing: lane-aligned.  ~48 MiB scoped VMEM total (fits v7x's
    # 64 MiB, comfortable on v5e/v6e's 128 MiB); most of it feeds the
    # double-buffered image stream.  The C (sublane) dim is padded to the
    # dtype's sublane quantum in VMEM, so the cap uses the padded footprint.
    VMEM_LIMIT = 48 << 20
    per_buf = (VMEM_LIMIT - (8 << 20)) // 2
    subq = max(8, 32 // itemsize)                 # f32:8  bf16:16  int8:32
    c_pad = _round_up(C, subq)
    if HW <= 128:
        HWb = HW                                  # single full-dim chunk
    else:
        cap = max(128, (per_buf // (Nb * c_pad * itemsize)) // 128 * 128)
        HWb = min(cap, (HW // 128) * 128)
    num_k = pl.cdiv(HW, HWb)
    G = min(128, HW)                              # lane width of the GAP partial

    grid = (num_b, num_k)
    const = lambda b, k: (0, 0)                   # weights stay VMEM-resident

    weight_args = (params["ws"], params["bs"], params["w1"], params["b1"],
                   params["w2"], params["b2"], params["w3"], params["b3"])
    flops = (N * C * HW
             + 2 * N * (C * FEAT + FEAT * H1 + H1 * H2 + H2 * OUT))
    bytes_accessed = (int(x3.size) * itemsize
                      + sum(int(a.size) * a.dtype.itemsize for a in weight_args)
                      + N * OUT * 4)

    out = pl.pallas_call(
        functools.partial(creative_net_kernel, hw=HW, hwb=HWb, num_k=num_k),
        out_shape=jax.ShapeDtypeStruct((N, OUT), jnp.float32),
        grid=grid,
        in_specs=[
            pl.BlockSpec((Nb, C, HWb), lambda b, k: (b, 0, k)),   # image stream
            pl.BlockSpec((C, FEAT), const),       # backbone-stub projection (bf16)
            pl.BlockSpec((1, FEAT), const),
            pl.BlockSpec((FEAT, H1), const),      # fc1
            pl.BlockSpec((1, H1), const),
            pl.BlockSpec((H1, H2), const),        # fc2
            pl.BlockSpec((1, H2), const),
            pl.BlockSpec((H2, OUT), const),       # fc3
            pl.BlockSpec((1, OUT), const),
        ],
        out_specs=pl.BlockSpec((Nb, OUT), lambda b, k: (b, 0)),
        scratch_shapes=[pltpu.VMEM((Nb, C, G), jnp.float32)],     # GAP partials
        compiler_params=pltpu.CompilerParams(
            dimension_semantics=("parallel", "arbitrary"),
            vmem_limit_bytes=VMEM_LIMIT),
        cost_estimate=pl.CostEstimate(flops=flops,
                                      transcendentals=N * OUT,
                                      bytes_accessed=bytes_accessed),
    )(x3, *weight_args)

    return out[:, :num_classes]


if __name__ == "__main__":
    key = jax.random.PRNGKey(0)
    k_param, k_x = jax.random.split(key)

    # Small NCHW image batch (RGB, as mobilenet_v3_small expects).
    x = jax.random.normal(k_x, (2, 3, 16, 16), jnp.float32)
    params = init_params(k_param, in_channels=3, feat_dim=1000,
                         num_output_classes=2)

    out = creative_net_forward(x, params)
    out = jax.block_until_ready(out)

    assert out.shape == (2, 2), out.shape
    assert bool(jnp.all(jnp.isfinite(out)))
    assert bool(jnp.all((out >= 0.0) & (out <= 1.0)))  # post-sigmoid range
    print("KERNEL_OK")
</pallas_src>

<mosaic_0001>
module attributes {stable_mosaic.version = 11 : i64} {
  func.func @creative_net_kernel(%arg0: i32, %arg1: i32, %arg2: memref<2x3x256xf32, #tpu.memory_space<vmem>>, %arg3: memref<3x1024xbf16, #tpu.memory_space<vmem>>, %arg4: memref<1x1024xf32, #tpu.memory_space<vmem>>, %arg5: memref<1024x128xbf16, #tpu.memory_space<vmem>>, %arg6: memref<1x128xf32, #tpu.memory_space<vmem>>, %arg7: memref<128x128xbf16, #tpu.memory_space<vmem>>, %arg8: memref<1x128xf32, #tpu.memory_space<vmem>>, %arg9: memref<128x128xbf16, #tpu.memory_space<vmem>>, %arg10: memref<1x128xf32, #tpu.memory_space<vmem>>, %arg11: memref<2x128xf32, #tpu.memory_space<vmem>>, %arg12: memref<2x3x128xf32, #tpu.memory_space<vmem>>) attributes {dimension_semantics = [#tpu.dimension_semantics<parallel>, #tpu.dimension_semantics<arbitrary>], iteration_bounds = array<i64: 1, 1>, scalar_prefetch = 0 : i64, scratch_operands = 1 : i64, tpu.core_type = #tpu.core_type<tc>, window_params = [{transform_indices = @transform_0, window_bounds = array<i64: 2, 3, 256>}, {pipeline_mode = #tpu.pipeline_mode<synchronous>, transform_indices = @transform_1, window_bounds = array<i64: 3, 1024>}, {pipeline_mode = #tpu.pipeline_mode<synchronous>, transform_indices = @transform_2, window_bounds = array<i64: 1, 1024>}, {pipeline_mode = #tpu.pipeline_mode<synchronous>, transform_indices = @transform_3, window_bounds = array<i64: 1024, 128>}, {pipeline_mode = #tpu.pipeline_mode<synchronous>, transform_indices = @transform_4, window_bounds = array<i64: 1, 128>}, {pipeline_mode = #tpu.pipeline_mode<synchronous>, transform_indices = @transform_5, window_bounds = array<i64: 128, 128>}, {pipeline_mode = #tpu.pipeline_mode<synchronous>, transform_indices = @transform_6, window_bounds = array<i64: 1, 128>}, {pipeline_mode = #tpu.pipeline_mode<synchronous>, transform_indices = @transform_7, window_bounds = array<i64: 128, 128>}, {pipeline_mode = #tpu.pipeline_mode<synchronous>, transform_indices = @transform_8, window_bounds = array<i64: 1, 128>}, {transform_indices = @transform_9, window_bounds = array<i64: 2, 128>}]} {
    %c0_i32 = arith.constant 0 : i32
    %0 = arith.cmpi eq, %arg1, %c0_i32 : i32
    %1 = arith.extui %0 : i1 to i32
    %c0_i32_0 = arith.constant 0 : i32
    %2 = arith.cmpi ne, %1, %c0_i32_0 : i32
    scf.if %2 {
      %cst_13 = arith.constant 0.000000e+00 : f32
      %14 = vector.broadcast %cst_13 : f32 to vector<2x3x128xf32>
      %c0_14 = arith.constant 0 : index
      %c0_15 = arith.constant 0 : index
      %c0_16 = arith.constant 0 : index
      %15 = vector.load %arg12[%c0_14, %c0_15, %c0_16] : memref<2x3x128xf32, #tpu.memory_space<vmem>>, vector<2x3x128xf32>
      tpu.vector_store %arg12[%c0_14, %c0_15, %c0_16], %14 {strides = array<i32>} : memref<2x3x128xf32, #tpu.memory_space<vmem>>, vector<2x3x128xf32>,
    } else {
    }
    %c0 = arith.constant 0 : index
    %c0_1 = arith.constant 0 : index
    %c0_2 = arith.constant 0 : index
    %3 = vector.load %arg12[%c0, %c0_1, %c0_2] : memref<2x3x128xf32, #tpu.memory_space<vmem>>, vector<2x3x128xf32>
    %cst = arith.constant 0.000000e+00 : f32
    %4 = vector.broadcast %cst : f32 to vector<2x3x128xf32>
    %c0_3 = arith.constant 0 : index
    %c0_4 = arith.constant 0 : index
    %c0_5 = arith.constant 0 : index
    %5 = vector.load %arg2[%c0_3, %c0_4, %c0_5] : memref<2x3x256xf32, #tpu.memory_space<vmem>>, vector<2x3x128xf32>
    %6 = arith.addf %4, %5 : vector<2x3x128xf32>
    %c0_6 = arith.constant 0 : index
    %c0_7 = arith.constant 0 : index
    %c128 = arith.constant 128 : index
    %7 = vector.load %arg2[%c0_6, %c0_7, %c128] : memref<2x3x256xf32, #tpu.memory_space<vmem>>, vector<2x3x128xf32>
    %8 = arith.addf %6, %7 : vector<2x3x128xf32>
    %9 = arith.addf %3, %8 : vector<2x3x128xf32>
    %c0_8 = arith.constant 0 : index
    %c0_9 = arith.constant 0 : index
    %c0_10 = arith.constant 0 : index
    %10 = vector.load %arg12[%c0_8, %c0_9, %c0_10] : memref<2x3x128xf32, #tpu.memory_space<vmem>>, vector<2x3x128xf32>
    tpu.vector_store %arg12[%c0_8, %c0_9, %c0_10], %9 {strides = array<i32>} : memref<2x3x128xf32, #tpu.memory_space<vmem>>, vector<2x3x128xf32>,
    %c0_i32_11 = arith.constant 0 : i32
    %11 = arith.cmpi eq, %arg1, %c0_i32_11 : i32
    %12 = arith.extui %11 : i1 to i32
    %c0_i32_12 = arith.constant 0 : i32
    %13 = arith.cmpi ne, %12, %c0_i32_12 : i32
    scf.if %13 {
      %c0_13 = arith.constant 0 : index
      %c0_14 = arith.constant 0 : index
      %c0_15 = arith.constant 0 : index
      %14 = vector.load %arg12[%c0_13, %c0_14, %c0_15] : memref<2x3x128xf32, #tpu.memory_space<vmem>>, vector<2x3x128xf32>
      %cst_16 = arith.constant dense<0.000000e+00> : vector<2x3xf32>
      %15 = vector.multi_reduction <add>, %14, %cst_16 [2] : vector<2x3x128xf32> to vector<2x3xf32>
      %cst_17 = arith.constant 3.906250e-03 : f32
      %16 = vector.broadcast %cst_17 : f32 to vector<2x3xf32>
      %17 = arith.mulf %15, %16 : vector<2x3xf32>
      %18 = arith.truncf %17 : vector<2x3xf32> to vector<2x3xbf16>
      %c0_18 = arith.constant 0 : index
      %c0_19 = arith.constant 0 : index
      %19 = vector.load %arg3[%c0_18, %c0_19] : memref<3x1024xbf16, #tpu.memory_space<vmem>>, vector<3x1024xbf16>
      %cst_20 = arith.constant dense<0.000000e+00> : vector<2x1024xf32>
      %20 = tpu.matmul %18, %19, %cst_20 {dimension_numbers = #tpu.dot_dimension_numbers<[1], [0], [0], [1], [0, 0, 1, 1], [], []>} : vector<2x3xbf16>, vector<3x1024xbf16>, vector<2x1024xf32> -> vector<2x1024xf32>
      %c0_21 = arith.constant 0 : index
      %c0_22 = arith.constant 0 : index
      %21 = vector.load %arg4[%c0_21, %c0_22] : memref<1x1024xf32, #tpu.memory_space<vmem>>, vector<1x1024xf32>
      %22 = vector.broadcast %21 : vector<1x1024xf32> to vector<2x1024xf32>
      %23 = arith.addf %20, %22 : vector<2x1024xf32>
      %24 = arith.truncf %23 : vector<2x1024xf32> to vector<2x1024xbf16>
      %c0_23 = arith.constant 0 : index
      %c0_24 = arith.constant 0 : index
      %25 = vector.load %arg5[%c0_23, %c0_24] : memref<1024x128xbf16, #tpu.memory_space<vmem>>, vector<1024x128xbf16>
      %cst_25 = arith.constant dense<0.000000e+00> : vector<2x128xf32>
      %26 = tpu.matmul %24, %25, %cst_25 {dimension_numbers = #tpu.dot_dimension_numbers<[1], [0], [0], [1], [0, 0, 1, 1], [], []>} : vector<2x1024xbf16>, vector<1024x128xbf16>, vector<2x128xf32> -> vector<2x128xf32>
      %c0_26 = arith.constant 0 : index
      %c0_27 = arith.constant 0 : index
      %27 = vector.load %arg6[%c0_26, %c0_27] : memref<1x128xf32, #tpu.memory_space<vmem>>, vector<1x128xf32>
      %28 = vector.broadcast %27 : vector<1x128xf32> to vector<2x128xf32>
      %29 = arith.addf %26, %28 : vector<2x128xf32>
      %cst_28 = arith.constant 0.000000e+00 : f32
      %30 = vector.broadcast %cst_28 : f32 to vector<2x128xf32>
      %31 = arith.cmpf ogt, %29, %30 : vector<2x128xf32>
      %cst_29 = arith.constant 0.00999999977 : f32
      %32 = vector.broadcast %cst_29 : f32 to vector<2x128xf32>
      %33 = arith.mulf %32, %29 : vector<2x128xf32>
      %34 = arith.select %31, %29, %33 : vector<2x128xi1>, vector<2x128xf32>
      %35 = arith.truncf %34 : vector<2x128xf32> to vector<2x128xbf16>
      %c0_30 = arith.constant 0 : index
      %c0_31 = arith.constant 0 : index
      %36 = vector.load %arg7[%c0_30, %c0_31] : memref<128x128xbf16, #tpu.memory_space<vmem>>, vector<128x128xbf16>
      %cst_32 = arith.constant dense<0.000000e+00> : vector<2x128xf32>
      %37 = tpu.matmul %35, %36, %cst_32 {dimension_numbers = #tpu.dot_dimension_numbers<[1], [0], [0], [1], [0, 0, 1, 1], [], []>} : vector<2x128xbf16>, vector<128x128xbf16>, vector<2x128xf32> -> vector<2x128xf32>
      %c0_33 = arith.constant 0 : index
      %c0_34 = arith.constant 0 : index
      %38 = vector.load %arg8[%c0_33, %c0_34] : memref<1x128xf32, #tpu.memory_space<vmem>>, vector<1x128xf32>
      %39 = vector.broadcast %38 : vector<1x128xf32> to vector<2x128xf32>
      %40 = arith.addf %37, %39 : vector<2x128xf32>
      %cst_35 = arith.constant 0.000000e+00 : f32
      %41 = vector.broadcast %cst_35 : f32 to vector<2x128xf32>
      %42 = arith.cmpf ogt, %40, %41 : vector<2x128xf32>
      %cst_36 = arith.constant 0.00999999977 : f32
      %43 = vector.broadcast %cst_36 : f32 to vector<2x128xf32>
      %44 = arith.mulf %43, %40 : vector<2x128xf32>
      %45 = arith.select %42, %40, %44 : vector<2x128xi1>, vector<2x128xf32>
      %46 = arith.truncf %45 : vector<2x128xf32> to vector<2x128xbf16>
      %c0_37 = arith.constant 0 : index
      %c0_38 = arith.constant 0 : index
      %47 = vector.load %arg9[%c0_37, %c0_38] : memref<128x128xbf16, #tpu.memory_space<vmem>>, vector<128x128xbf16>
      %cst_39 = arith.constant dense<0.000000e+00> : vector<2x128xf32>
      %48 = tpu.matmul %46, %47, %cst_39 {dimension_numbers = #tpu.dot_dimension_numbers<[1], [0], [0], [1], [0, 0, 1, 1], [], []>} : vector<2x128xbf16>, vector<128x128xbf16>, vector<2x128xf32> -> vector<2x128xf32>
      %c0_40 = arith.constant 0 : index
      %c0_41 = arith.constant 0 : index
      %49 = vector.load %arg10[%c0_40, %c0_41] : memref<1x128xf32, #tpu.memory_space<vmem>>, vector<1x128xf32>
      %50 = vector.broadcast %49 : vector<1x128xf32> to vector<2x128xf32>
      %51 = arith.addf %48, %50 : vector<2x128xf32>
      %cst_42 = arith.constant 0.000000e+00 : f32
      %52 = vector.broadcast %cst_42 : f32 to vector<2x128xf32>
      %53 = arith.cmpf ogt, %51, %52 : vector<2x128xf32>
      %cst_43 = arith.constant 0.00999999977 : f32
      %54 = vector.broadcast %cst_43 : f32 to vector<2x128xf32>
      %55 = arith.mulf %54, %51 : vector<2x128xf32>
      %56 = arith.select %53, %51, %55 : vector<2x128xi1>, vector<2x128xf32>
      %57 = arith.negf %56 : vector<2x128xf32>
      %58 = math.exp %57 : vector<2x128xf32>
      %cst_44 = arith.constant 1.000000e+00 : f32
      %59 = vector.broadcast %cst_44 : f32 to vector<2x128xf32>
      %60 = arith.addf %59, %58 : vector<2x128xf32>
      %61 = arith.divf %59, %60 : vector<2x128xf32>
      %c0_45 = arith.constant 0 : index
      %c0_46 = arith.constant 0 : index
      %62 = vector.load %arg11[%c0_45, %c0_46] : memref<2x128xf32, #tpu.memory_space<vmem>>, vector<2x128xf32>
      tpu.vector_store %arg11[%c0_45, %c0_46], %61 {strides = array<i32>} : memref<2x128xf32, #tpu.memory_space<vmem>>, vector<2x128xf32>,
    } else {
    }
    return
  }
  func.func @transform_0(%arg0: i32, %arg1: i32) -> (i32, i32, i32) {
    %c0_i32 = arith.constant 0 : i32
    %c0_i32_0 = arith.constant 0 : i32
    return %arg0, %c0_i32, %arg1 : i32, i32, i32
  }
  func.func @transform_1(%arg0: i32, %arg1: i32) -> (i32, i32) {
    %c0_i32 = arith.constant 0 : i32
    %c0_i32_0 = arith.constant 0 : i32
    %c0_i32_1 = arith.constant 0 : i32
    return %c0_i32, %c0_i32_0 : i32, i32
  }
  func.func @transform_2(%arg0: i32, %arg1: i32) -> (i32, i32) {
    %c0_i32 = arith.constant 0 : i32
    %c0_i32_0 = arith.constant 0 : i32
    %c0_i32_1 = arith.constant 0 : i32
    return %c0_i32, %c0_i32_0 : i32, i32
  }
  func.func @transform_3(%arg0: i32, %arg1: i32) -> (i32, i32) {
    %c0_i32 = arith.constant 0 : i32
    %c0_i32_0 = arith.constant 0 : i32
    %c0_i32_1 = arith.constant 0 : i32
    return %c0_i32, %c0_i32_0 : i32, i32
  }
  func.func @transform_4(%arg0: i32, %arg1: i32) -> (i32, i32) {
    %c0_i32 = arith.constant 0 : i32
    %c0_i32_0 = arith.constant 0 : i32
    %c0_i32_1 = arith.constant 0 : i32
    return %c0_i32, %c0_i32_0 : i32, i32
  }
  func.func @transform_5(%arg0: i32, %arg1: i32) -> (i32, i32) {
    %c0_i32 = arith.constant 0 : i32
    %c0_i32_0 = arith.constant 0 : i32
    %c0_i32_1 = arith.constant 0 : i32
    return %c0_i32, %c0_i32_0 : i32, i32
  }
  func.func @transform_6(%arg0: i32, %arg1: i32) -> (i32, i32) {
    %c0_i32 = arith.constant 0 : i32
    %c0_i32_0 = arith.constant 0 : i32
    %c0_i32_1 = arith.constant 0 : i32
    return %c0_i32, %c0_i32_0 : i32, i32
  }
  func.func @transform_7(%arg0: i32, %arg1: i32) -> (i32, i32) {
    %c0_i32 = arith.constant 0 : i32
    %c0_i32_0 = arith.constant 0 : i32
    %c0_i32_1 = arith.constant 0 : i32
    return %c0_i32, %c0_i32_0 : i32, i32
  }
  func.func @transform_8(%arg0: i32, %arg1: i32) -> (i32, i32) {
    %c0_i32 = arith.constant 0 : i32
    %c0_i32_0 = arith.constant 0 : i32
    %c0_i32_1 = arith.constant 0 : i32
    return %c0_i32, %c0_i32_0 : i32, i32
  }
  func.func @transform_9(%arg0: i32, %arg1: i32) -> (i32, i32) {
    %c0_i32 = arith.constant 0 : i32
    %c0_i32_0 = arith.constant 0 : i32
    return %arg0, %c0_i32 : i32, i32
  }
}

</mosaic_0001>

<llo_original>
// kernel: tpu_custom_call.1
$region0: #{tpu_custom_call.1}
  #allocation0 [shape = 'u32[]', space=smem, size = 0x4, offset = 0x4, fixed_abs, tag = 'smem constant byte address 0x4 - core index']
  #allocation1 [shape = 'u32[72,128]{1,0:T(1,128)}', space=vmem, size = 0x9000, scoped, tag = 'internal scratch']
  #allocation2 [shape = 'f32[2,3,128]{2,1,0:T(4,128)}', space=vmem, size = 0x1000, scoped, tag = 'scratch operand']
  %s0 = inlined_call_operand.vmem [shape: f32[2,3,256], index: 0, kind: input, shape index: {}]
  %s1 = inlined_call_operand.vmem [shape: bf16[3,1024], index: 1, kind: input, shape index: {}]
  %s2 = inlined_call_operand.vmem [shape: f32[1,1024], index: 2, kind: input, shape index: {}]
  %s3 = inlined_call_operand.hbm [shape: bf16[1024,128], index: 3, kind: input, shape index: {}]
  %s4 = inlined_call_operand.vmem [shape: f32[1,128], index: 4, kind: input, shape index: {}]
  %s5 = inlined_call_operand.hbm [shape: bf16[128,128], index: 5, kind: input, shape index: {}]
  %s6 = inlined_call_operand.vmem [shape: f32[1,128], index: 6, kind: input, shape index: {}]
  %s7 = inlined_call_operand.hbm [shape: bf16[128,128], index: 7, kind: input, shape index: {}]
  %s8 = inlined_call_operand.vmem [shape: f32[1,128], index: 8, kind: input, shape index: {}]
  %s9 = inlined_call_operand.hbm [shape: f32[2,128], index: 9, kind: output, shape index: {}]
  %s10 = sld [smem:[#allocation0]]
  $region66: #{tpu_custom_call.1} parent=0
    _
  %s12 = ssub.s32 1, %s10
  %s13 = scalar_select 0, %s12, %s10
  $region1: #{tpu_custom_call.1} parent=0
    #allocation3 [shape = 'u8[262144]{0}', space=vmem, size = 0x40000, scoped, tag = 'input window, operand 3, single buffered']
    #allocation4 [shape = 's32[1]{0}', space=sflag, size = 0x4, scoped, tag = 'scoped memory for tpu_custom_call.1']
    #allocation5 [shape = 's32[1]{0}', space=sflag, size = 0x4, scoped, tag = 'scoped memory for tpu_custom_call.1']
    #allocation6 [shape = 'u8[32768]{0}', space=vmem, size = 0x8000, scoped, tag = 'input window, operand 5, single buffered']
    #allocation7 [shape = 's32[1]{0}', space=sflag, size = 0x4, scoped, tag = 'scoped memory for tpu_custom_call.1']
    #allocation8 [shape = 'u8[32768]{0}', space=vmem, size = 0x8000, scoped, tag = 'input window, operand 7, single buffered']
    #allocation9 [shape = 'u8[1024]{0}', space=vmem, size = 0x400, scoped, tag = 'output window, operand 0, single buffered']
    %14 = vsyncpa [#allocation4], 0
    %15 = vsyncpa [#allocation7], 0
    %16 = vsyncpa [#allocation5], 0
    // Predicated region
    $region2: #{tpu_custom_call.1} parent=1 // pred_check
      _
    $region3: #{tpu_custom_call.1} parent=1 // pred_check_branch
      %18 = sbr.rel (0) target = $region5
    $region4: #{tpu_custom_call.1} parent=1 // pred_region
      _
    $region5: #{tpu_custom_call.1} parent=1 // pred_fallthru
      _
    // Predicated region
    $region6: #{tpu_custom_call.1} parent=1 // pred_check
      _
    $region7: #{tpu_custom_call.1} parent=1 // pred_check_branch
      %20 = sbr.rel (0) target = $region9
    $region8: #{tpu_custom_call.1} parent=1 // pred_region
      _
    $region9: #{tpu_custom_call.1} parent=1 // pred_fallthru
      _
    // Predicated region
    $region10: #{tpu_custom_call.1} parent=1 // pred_check
      _
    $region11: #{tpu_custom_call.1} parent=1 // pred_check_branch
      %22 = sbr.rel (0) target = $region13
    $region12: #{tpu_custom_call.1} parent=1 // pred_region
      _
    $region13: #{tpu_custom_call.1} parent=1 // pred_fallthru
      _
    // Predicated region
    $region14: #{tpu_custom_call.1} parent=1 // pred_check
      _
    $region15: #{tpu_custom_call.1} parent=1 // pred_check_branch
      %24 = sbr.rel (0) target = $region17
    $region16: #{tpu_custom_call.1} parent=1 // pred_region
      %26 = vsyncadd [#allocation4], 0
      %s27 = sshll.u32 %s3, 4
      %s28 = int_to_ptr.hbm [resolvable:$true] %s27
      %s29 = sshll.u32 [#allocation3], 4
      %s30 = int_to_ptr.vmem [resolvable:$true] %s29
      %35 = dma.hbm_to_vmem [thread:$0]  %s28, 8192, %s30, [#allocation4], 64, 64, 4
    $region17: #{tpu_custom_call.1} parent=1 // pred_fallthru
      _
    // Predicated region
    $region18: #{tpu_custom_call.1} parent=1 // pred_check
      _
    $region19: #{tpu_custom_call.1} parent=1 // pred_check_branch
      %37 = sbr.rel (0) target = $region21
    $region20: #{tpu_custom_call.1} parent=1 // pred_region
      _
    $region21: #{tpu_custom_call.1} parent=1 // pred_fallthru
      _
    // Predicated region
    $region22: #{tpu_custom_call.1} parent=1 // pred_check
      _
    $region23: #{tpu_custom_call.1} parent=1 // pred_check_branch
      %39 = sbr.rel (0) target = $region25
    $region24: #{tpu_custom_call.1} parent=1 // pred_region
      %41 = vsyncadd [#allocation7], 0
      %s42 = sshll.u32 %s5, 4
      %s43 = int_to_ptr.hbm [resolvable:$true] %s42
      %s44 = sshll.u32 [#allocation6], 4
      %s45 = int_to_ptr.vmem [resolvable:$true] %s44
      %50 = dma.hbm_to_vmem [thread:$0]  %s43, 1024, %s45, [#allocation7], 64, 64, 4
    $region25: #{tpu_custom_call.1} parent=1 // pred_fallthru
      _
    // Predicated region
    $region26: #{tpu_custom_call.1} parent=1 // pred_check
      _
    $region27: #{tpu_custom_call.1} parent=1 // pred_check_branch
      %52 = sbr.rel (0) target = $region29
    $region28: #{tpu_custom_call.1} parent=1 // pred_region
      _
    $region29: #{tpu_custom_call.1} parent=1 // pred_fallthru
      _
    // Predicated region
    $region30: #{tpu_custom_call.1} parent=1 // pred_check
      _
    $region31: #{tpu_custom_call.1} parent=1 // pred_check_branch
      %54 = sbr.rel (0) target = $region33
    $region32: #{tpu_custom_call.1} parent=1 // pred_region
      %56 = vsyncadd [#allocation7], 0
      %s57 = sshll.u32 %s7, 4
      %s58 = int_to_ptr.hbm [resolvable:$true] %s57
      %s59 = sshll.u32 [#allocation8], 4
      %s60 = int_to_ptr.vmem [resolvable:$true] %s59
      %65 = dma.hbm_to_vmem [thread:$0]  %s58, 1024, %s60, [#allocation7], 64, 64, 4
    $region33: #{tpu_custom_call.1} parent=1 // pred_fallthru
      _
    // Predicated region
    $region34: #{tpu_custom_call.1} parent=1 // pred_check
      _
    $region35: #{tpu_custom_call.1} parent=1 // pred_check_branch
      %67 = sbr.rel (0) target = $region37
    $region36: #{tpu_custom_call.1} parent=1 // pred_region
      _
    $region37: #{tpu_custom_call.1} parent=1 // pred_fallthru
      _
    // Predicated region
    $region38: #{tpu_custom_call.1} parent=1 // pred_check
      _
    $region39: #{tpu_custom_call.1} parent=1 // pred_check_branch
      %69 = sbr.rel (0) target = $region41
    $region40: #{tpu_custom_call.1} parent=1 // pred_region
      %71 = dma.done [#allocation4], 8192
    $region41: #{tpu_custom_call.1} parent=1 // pred_fallthru
      _
    // Predicated region
    $region42: #{tpu_custom_call.1} parent=1 // pred_check
      _
    $region43: #{tpu_custom_call.1} parent=1 // pred_check_branch
      %73 = sbr.rel (0) target = $region45
    $region44: #{tpu_custom_call.1} parent=1 // pred_region
      %75 = dma.done [#allocation7], 1024
    $region45: #{tpu_custom_call.1} parent=1 // pred_fallthru
      _
    // Predicated region
    $region46: #{tpu_custom_call.1} parent=1 // pred_check
      _
    $region47: #{tpu_custom_call.1} parent=1 // pred_check_branch
      %77 = sbr.rel (0) target = $region49
    $region48: #{tpu_custom_call.1} parent=1 // pred_region
      %79 = dma.done [#allocation7], 1024
    $region49: #{tpu_custom_call.1} parent=1 // pred_fallthru
      _
    %p81 = scmp.eq.s32.totalorder 0, 0
    // Predicated region
    $region50: #{tpu_custom_call.1} parent=1 // pred_check
      %p82 = pneg %p81
    $region51: #{tpu_custom_call.1} parent=1 // pred_check_branch
      %84 = sbr.rel (%p82) target = $region53
    $region52: #{tpu_custom_call.1} parent=1 // pred_region
      %85 = vst [vmem:[#allocation2] sm:$0x7] 0.0
      %86 = vst [vmem:[#allocation2 + $0x4] sm:$0x7] 0.0
    $region53: #{tpu_custom_call.1} parent=1 // pred_fallthru
      _
    %v87 = vld [vmem:[#allocation2] sm:$0x7]
    %v88 = vld [vmem:[#allocation2 + $0x4] sm:$0x7]
    %v89 = vld [vmem:[%s0] sm:$0x7]
    %v90 = vld [vmem:[%s0 + $0x8] sm:$0x7]
    %v91 = vadd.f32 %v89, 0.0
    %v92 = vadd.f32 %v90, 0.0
    %v93 = vld [vmem:[%s0 + $0x4] sm:$0x7]
    %v94 = vld [vmem:[%s0 + $0xc] sm:$0x7]
    %v95 = vadd.f32 %v91, %v93
    %v96 = vadd.f32 %v92, %v94
    %v97 = vadd.f32 %v87, %v95
    %v98 = vadd.f32 %v88, %v96
    %99 = vst [vmem:[#allocation2] sm:$0x7] %v97
    %100 = vst [vmem:[#allocation2 + $0x4] sm:$0x7] %v98
    // Predicated region
    $region54: #{tpu_custom_call.1} parent=1 // pred_check
      %p101 = pneg %p81
    $region55: #{tpu_custom_call.1} parent=1 // pred_check_branch
      %103 = sbr.rel (%p101) target = $region57
    $region56: #{tpu_custom_call.1} parent=1 // pred_region
      %v104 = vld [vmem:[#allocation2] sm:$0x7]
      %v105 = vld [vmem:[#allocation2 + $0x4] sm:$0x7]
      %vm106 = vcmask 1042432
      %v107 = vsel %vm106, %v104, 0.0
      %108 = vadd.xlane.f32.xlu0 %v107
      %v109 = vpop.xlane.xlu0 %108
      %v110 = vsel %vm106, %v105, 0.0
      %111 = vadd.xlane.f32.xlu0 %v110
      %v112 = vpop.xlane.xlu0 %111
      %v113 = vmul.f32 %v109, 0.00390625
      %v114 = vmul.f32 %v112, 0.00390625
      %v115 = vpack.c.bf16 %v113, %v113
      %v116 = vpack.c.bf16 %v114, %v114
      %v117 = vld [vmem:[%s1] sm:$0xff]
      %v118 = vld [vmem:[%s1 + $0x8] sm:$0xff]
      %v119 = vld [vmem:[%s2] sm:$0xff]
      %v121 = vperm.slane %v119, 0
      %v122 = vperm.slane %v119, 1
      %v123 = vperm.slane %v119, 2
      %v124 = vperm.slane %v119, 3
      %v125 = vperm.slane %v119, 4
      %v126 = vperm.slane %v119, 5
      %v127 = vperm.slane %v119, 6
      %v128 = vperm.slane %v119, 7
      %v139 = vunpack.c.l.b16 %v115
      %v140 = vunpack.c.l.b16 %v116
      %v141 = vlaneseq
      %v142 = vand.u32 %v141, 127
      %v143 = vperm.slane %v139, %v142
      %v144 = vperm.slane %v140, %v142
      %vm145 = vcmask 1041409
      %v146 = vsel %vm145, %v144, %v143
      %v147 = vpack.c.b16 %v146, %v146
      %149 = vst [vmem:[#allocation1] ss:$4 sm:$0xff] %v117
      %s151 = scalar_lea.vmem [#allocation1], 32
      %152 = vst [vmem:[%s151] ss:$4 sm:$0xff] %v118
      %v153 = vld.sshfl [vmem:[#allocation1] sm:$0xff pattern:$0x73625140]
      %v154 = vld.sshfl [vmem:[#allocation1 + $0x8] sm:$0xff pattern:$0x73625140]
      %v155 = vld.sshfl [vmem:[#allocation1 + $0x10] sm:$0xff pattern:$0x73625140]
      %v156 = vld.sshfl [vmem:[#allocation1 + $0x18] sm:$0xff pattern:$0x73625140]
      %v157 = vld.sshfl [vmem:[#allocation1 + $0x20] sm:$0xff pattern:$0x73625140]
      %v158 = vld.sshfl [vmem:[#allocation1 + $0x28] sm:$0xff pattern:$0x73625140]
      %v159 = vld.sshfl [vmem:[#allocation1 + $0x30] sm:$0xff pattern:$0x73625140]
      %v160 = vld.sshfl [vmem:[#allocation1 + $0x38] sm:$0xff pattern:$0x73625140]
      %vm161 = vcmask 23552
      %v163 = vsel %vm161, %v147, 0
      %vm165 = vcmask 1040384
      %vm166 = vcmask 1041408
      %v167 = vsel %vm165, 4294967295, 65535
      %v168 = vsel %vm166, %v167, 0
      %v169 = vand.u32 %v153, %v168
      %v171 = vand.u32 %v154, %v168
      %v173 = vand.u32 %v155, %v168
      %v175 = vand.u32 %v156, %v168
      %v177 = vand.u32 %v157, %v168
      %v179 = vand.u32 %v158, %v168
      %v181 = vand.u32 %v159, %v168
      %v183 = vand.u32 %v160, %v168
      %185 = vmatpush.bf16.msra.mxu0 0
      %186 = vmatpush.bf16.msra.mxu0 0
      %187 = vmatpush.bf16.msra.mxu0 0
      %188 = vmatpush.bf16.msra.mxu0 0
      %189 = vmatpush.bf16.msra.mxu0 0
      %190 = vmatpush.bf16.msra.mxu0 0
      %191 = vmatpush.bf16.msra.mxu0 0
      %192 = vmatpush.bf16.msra.mxu0 %v169
      %193 = vmatmul.bf16.gmra.mxu0 %v163
      %v194 = vpop.f32.mrf.mxu0
      %v195 = vadd.f32 %v121, %v194
      %v196 = vpop.f32.mrf.mxu0
      %197 = vdwg.mxu0
      %198 = vmatpush.bf16.msra.mxu0 0
      %199 = vmatpush.bf16.msra.mxu0 0
      %200 = vmatpush.bf16.msra.mxu0 0
      %201 = vmatpush.bf16.msra.mxu0 0
      %202 = vmatpush.bf16.msra.mxu0 0
      %203 = vmatpush.bf16.msra.mxu0 0
      %204 = vmatpush.bf16.msra.mxu0 0
      %205 = vmatpush.bf16.msra.mxu0 %v171
      %206 = vmatmul.bf16.gmra.mxu0 %v163
      %v207 = vpop.f32.mrf.mxu0
      %v208 = vadd.f32 %v122, %v207
      %v209 = vpop.f32.mrf.mxu0
      %210 = vdwg.mxu0
      %211 = vmatpush.bf16.msra.mxu0 0
      %212 = vmatpush.bf16.msra.mxu0 0
      %213 = vmatpush.bf16.msra.mxu0 0
      %214 = vmatpush.bf16.msra.mxu0 0
      %215 = vmatpush.bf16.msra.mxu0 0
      %216 = vmatpush.bf16.msra.mxu0 0
      %217 = vmatpush.bf16.msra.mxu0 0
      %218 = vmatpush.bf16.msra.mxu0 %v173
      %219 = vmatmul.bf16.gmra.mxu0 %v163
      %v220 = vpop.f32.mrf.mxu0
      %v221 = vadd.f32 %v123, %v220
      %v222 = vpop.f32.mrf.mxu0
      %223 = vdwg.mxu0
      %224 = vmatpush.bf16.msra.mxu0 0
      %225 = vmatpush.bf16.msra.mxu0 0
      %226 = vmatpush.bf16.msra.mxu0 0
      %227 = vmatpush.bf16.msra.mxu0 0
      %228 = vmatpush.bf16.msra.mxu0 0
      %229 = vmatpush.bf16.msra.mxu0 0
      %230 = vmatpush.bf16.msra.mxu0 0
      %231 = vmatpush.bf16.msra.mxu0 %v175
      %232 = vmatmul.bf16.gmra.mxu0 %v163
      %v233 = vpop.f32.mrf.mxu0
      %v234 = vadd.f32 %v124, %v233
      %v235 = vpop.f32.mrf.mxu0
      %236 = vdwg.mxu0
      %237 = vmatpush.bf16.msra.mxu0 0
      %238 = vmatpush.bf16.msra.mxu0 0
      %239 = vmatpush.bf16.msra.mxu0 0
      %240 = vmatpush.bf16.msra.mxu0 0
      %241 = vmatpush.bf16.msra.mxu0 0
      %242 = vmatpush.bf16.msra.mxu0 0
      %243 = vmatpush.bf16.msra.mxu0 0
      %244 = vmatpush.bf16.msra.mxu0 %v177
      %245 = vmatmul.bf16.gmra.mxu0 %v163
      %v246 = vpop.f32.mrf.mxu0
      %v247 = vadd.f32 %v125, %v246
      %v248 = vpop.f32.mrf.mxu0
      %249 = vdwg.mxu0
      %250 = vmatpush.bf16.msra.mxu0 0
      %251 = vmatpush.bf16.msra.mxu0 0
      %252 = vmatpush.bf16.msra.mxu0 0
      %253 = vmatpush.bf16.msra.mxu0 0
      %254 = vmatpush.bf16.msra.mxu0 0
      %255 = vmatpush.bf16.msra.mxu0 0
      %256 = vmatpush.bf16.msra.mxu0 0
      %257 = vmatpush.bf16.msra.mxu0 %v179
      %258 = vmatmul.bf16.gmra.mxu0 %v163
      %v259 = vpop.f32.mrf.mxu0
      %v260 = vadd.f32 %v126, %v259
      %v261 = vpop.f32.mrf.mxu0
      %262 = vdwg.mxu0
      %263 = vmatpush.bf16.msra.mxu0 0
      %264 = vmatpush.bf16.msra.mxu0 0
      %265 = vmatpush.bf16.msra.mxu0 0
      %266 = vmatpush.bf16.msra.mxu0 0
      %267 = vmatpush.bf16.msra.mxu0 0
      %268 = vmatpush.bf16.msra.mxu0 0
      %269 = vmatpush.bf16.msra.mxu0 0
      %270 = vmatpush.bf16.msra.mxu0 %v181
      %271 = vmatmul.bf16.gmra.mxu0 %v163
      %v272 = vpop.f32.mrf.mxu0
      %v273 = vadd.f32 %v127, %v272
      %v274 = vpop.f32.mrf.mxu0
      %275 = vdwg.mxu0
      %276 = vmatpush.bf16.msra.mxu0 0
      %277 = vmatpush.bf16.msra.mxu0 0
      %278 = vmatpush.bf16.msra.mxu0 0
      %279 = vmatpush.bf16.msra.mxu0 0
      %280 = vmatpush.bf16.msra.mxu0 0
      %281 = vmatpush.bf16.msra.mxu0 0
      %282 = vmatpush.bf16.msra.mxu0 0
      %283 = vmatpush.bf16.msra.mxu0 %v183
      %284 = vmatmul.bf16.gmra.mxu0 %v163
      %v285 = vpop.f32.mrf.mxu0
      %v286 = vadd.f32 %v128, %v285
      %v287 = vpop.f32.mrf.mxu0
      %288 = vdwg.mxu0
      %v289 = vpack.c.bf16 %v195, %v195
      %v290 = vpack.c.bf16 %v208, %v208
      %v291 = vpack.c.bf16 %v221, %v221
      %v292 = vpack.c.bf16 %v234, %v234
      %v293 = vpack.c.bf16 %v247, %v247
      %v294 = vpack.c.bf16 %v260, %v260
      %v295 = vpack.c.bf16 %v273, %v273
      %v296 = vpack.c.bf16 %v286, %v286
      %v297 = vld [vmem:[#allocation3] sm:$0xf]
      %v298 = vld [vmem:[#allocation3 + $0x4] sm:$0xf]
      %v299 = vld [vmem:[#allocation3 + $0x8] sm:$0xf]
      %v300 = vld [vmem:[#allocation3 + $0xc] sm:$0xf]
      %v301 = vld [vmem:[#allocation3 + $0x10] sm:$0xf]
      %v302 = vld [vmem:[#allocation3 + $0x14] sm:$0xf]
      %v303 = vld [vmem:[#allocation3 + $0x18] sm:$0xf]
      %v304 = vld [vmem:[#allocation3 + $0x1c] sm:$0xf]
      %v305 = vld [vmem:[#allocation3 + $0x20] sm:$0xf]
      %v306 = vld [vmem:[#allocation3 + $0x24] sm:$0xf]
      %v307 = vld [vmem:[#allocation3 + $0x28] sm:$0xf]
      %v308 = vld [vmem:[#allocation3 + $0x2c] sm:$0xf]
      %v309 = vld [vmem:[#allocation3 + $0x30] sm:$0xf]
      %v310 = vld [vmem:[#allocation3 + $0x34] sm:$0xf]
      %v311 = vld [vmem:[#allocation3 + $0x38] sm:$0xf]
      %v312 = vld [vmem:[#allocation3 + $0x3c] sm:$0xf]
      %v313 = vld [vmem:[#allocation3 + $0x40] sm:$0xf]
      %v314 = vld [vmem:[#allocation3 + $0x44] sm:$0xf]
      %v315 = vld [vmem:[#allocation3 + $0x48] sm:$0xf]
      %v316 = vld [vmem:[#allocation3 + $0x4c] sm:$0xf]
      %v317 = vld [vmem:[#allocation3 + $0x50] sm:$0xf]
      %v318 = vld [vmem:[#allocation3 + $0x54] sm:$0xf]
      %v319 = vld [vmem:[#allocation3 + $0x58] sm:$0xf]
      %v320 = vld [vmem:[#allocation3 + $0x5c] sm:$0xf]
      %v321 = vld [vmem:[#allocation3 + $0x60] sm:$0xf]
      %v322 = vld [vmem:[#allocation3 + $0x64] sm:$0xf]
      %v323 = vld [vmem:[#allocation3 + $0x68] sm:$0xf]
      %v324 = vld [vmem:[#allocation3 + $0x6c] sm:$0xf]
      %v325 = vld [vmem:[#allocation3 + $0x70] sm:$0xf]
      %v326 = vld [vmem:[#allocation3 + $0x74] sm:$0xf]
      %v327 = vld [vmem:[#allocation3 + $0x78] sm:$0xf]
      %v328 = vld [vmem:[#allocation3 + $0x7c] sm:$0xf]
      %v329 = vld [vmem:[#allocation3 + $0x80] sm:$0xf]
      %v330 = vld [vmem:[#allocation3 + $0x84] sm:$0xf]
      %v331 = vld [vmem:[#allocation3 + $0x88] sm:$0xf]
      %v332 = vld [vmem:[#allocation3 + $0x8c] sm:$0xf]
      %v333 = vld [vmem:[#allocation3 + $0x90] sm:$0xf]
      %v334 = vld [vmem:[#allocation3 + $0x94] sm:$0xf]
      %v335 = vld [vmem:[#allocation3 + $0x98] sm:$0xf]
      %v336 = vld [vmem:[#allocation3 + $0x9c] sm:$0xf]
      %v337 = vld [vmem:[#allocation3 + $0xa0] sm:$0xf]
      %v338 = vld [vmem:[#allocation3 + $0xa4] sm:$0xf]
      %v339 = vld [vmem:[#allocation3 + $0xa8] sm:$0xf]
      %v340 = vld [vmem:[#allocation3 + $0xac] sm:$0xf]
      %v341 = vld [vmem:[#allocation3 + $0xb0] sm:$0xf]
      %v342 = vld [vmem:[#allocation3 + $0xb4] sm:$0xf]
      %v343 = vld [vmem:[#allocation3 + $0xb8] sm:$0xf]
      %v344 = vld [vmem:[#allocation3 + $0xbc] sm:$0xf]
      %v345 = vld [vmem:[#allocation3 + $0xc0] sm:$0xf]
      %v346 = vld [vmem:[#allocation3 + $0xc4] sm:$0xf]
      %v347 = vld [vmem:[#allocation3 + $0xc8] sm:$0xf]
      %v348 = vld [vmem:[#allocation3 + $0xcc] sm:$0xf]
      %v349 = vld [vmem:[#allocation3 + $0xd0] sm:$0xf]
      %v350 = vld [vmem:[#allocation3 + $0xd4] sm:$0xf]
      %v351 = vld [vmem:[#allocation3 + $0xd8] sm:$0xf]
      %v352 = vld [vmem:[#allocation3 + $0xdc] sm:$0xf]
      %v353 = vld [vmem:[#allocation3 + $0xe0] sm:$0xf]
      %v354 = vld [vmem:[#allocation3 + $0xe4] sm:$0xf]
      %v355 = vld [vmem:[#allocation3 + $0xe8] sm:$0xf]
      %v356 = vld [vmem:[#allocation3 + $0xec] sm:$0xf]
      %v357 = vld [vmem:[#allocation3 + $0xf0] sm:$0xf]
      %v358 = vld [vmem:[#allocation3 + $0xf4] sm:$0xf]
      %v359 = vld [vmem:[#allocation3 + $0xf8] sm:$0xf]
      %v360 = vld [vmem:[#allocation3 + $0xfc] sm:$0xf]
      %v361 = vld [vmem:[#allocation3 + $0x100] sm:$0xf]
      %v362 = vld [vmem:[#allocation3 + $0x104] sm:$0xf]
      %v363 = vld [vmem:[#allocation3 + $0x108] sm:$0xf]
      %v364 = vld [vmem:[#allocation3 + $0x10c] sm:$0xf]
      %v365 = vld [vmem:[#allocation3 + $0x110] sm:$0xf]
      %v366 = vld [vmem:[#allocation3 + $0x114] sm:$0xf]
      %v367 = vld [vmem:[#allocation3 + $0x118] sm:$0xf]
      %v368 = vld [vmem:[#allocation3 + $0x11c] sm:$0xf]
      %v369 = vld [vmem:[#allocation3 + $0x120] sm:$0xf]
      %v370 = vld [vmem:[#allocation3 + $0x124] sm:$0xf]
      %v371 = vld [vmem:[#allocation3 + $0x128] sm:$0xf]
      %v372 = vld [vmem:[#allocation3 + $0x12c] sm:$0xf]
      %v373 = vld [vmem:[#allocation3 + $0x130] sm:$0xf]
      %v374 = vld [vmem:[#allocation3 + $0x134] sm:$0xf]
      %v375 = vld [vmem:[#allocation3 + $0x138] sm:$0xf]
      %v376 = vld [vmem:[#allocation3 + $0x13c] sm:$0xf]
      %v377 = vld [vmem:[#allocation3 + $0x140] sm:$0xf]
      %v378 = vld [vmem:[#allocation3 + $0x144] sm:$0xf]
      %v379 = vld [vmem:[#allocation3 + $0x148] sm:$0xf]
      %v380 = vld [vmem:[#allocation3 + $0x14c] sm:$0xf]
      %v381 = vld [vmem:[#allocation3 + $0x150] sm:$0xf]
      %v382 = vld [vmem:[#allocation3 + $0x154] sm:$0xf]
      %v383 = vld [vmem:[#allocation3 + $0x158] sm:$0xf]
      %v384 = vld [vmem:[#allocation3 + $0x15c] sm:$0xf]
      %v385 = vld [vmem:[#allocation3 + $0x160] sm:$0xf]
      %v386 = vld [vmem:[#allocation3 + $0x164] sm:$0xf]
      %v387 = vld [vmem:[#allocation3 + $0x168] sm:$0xf]
      %v388 = vld [vmem:[#allocation3 + $0x16c] sm:$0xf]
      %v389 = vld [vmem:[#allocation3 + $0x170] sm:$0xf]
      %v390 = vld [vmem:[#allocation3 + $0x174] sm:$0xf]
      %v391 = vld [vmem:[#allocation3 + $0x178] sm:$0xf]
      %v392 = vld [vmem:[#allocation3 + $0x17c] sm:$0xf]
      %v393 = vld [vmem:[#allocation3 + $0x180] sm:$0xf]
      %v394 = vld [vmem:[#allocation3 + $0x184] sm:$0xf]
      %v395 = vld [vmem:[#allocation3 + $0x188] sm:$0xf]
      %v396 = vld [vmem:[#allocation3 + $0x18c] sm:$0xf]
      %v397 = vld [vmem:[#allocation3 + $0x190] sm:$0xf]
      %v398 = vld [vmem:[#allocation3 + $0x194] sm:$0xf]
      %v399 = vld [vmem:[#allocation3 + $0x198] sm:$0xf]
      %v400 = vld [vmem:[#allocation3 + $0x19c] sm:$0xf]
      %v401 = vld [vmem:[#allocation3 + $0x1a0] sm:$0xf]
      %v402 = vld [vmem:[#allocation3 + $0x1a4] sm:$0xf]
      %v403 = vld [vmem:[#allocation3 + $0x1a8] sm:$0xf]
      %v404 = vld [vmem:[#allocation3 + $0x1ac] sm:$0xf]
      %v405 = vld [vmem:[#allocation3 + $0x1b0] sm:$0xf]
      %v406 = vld [vmem:[#allocation3 + $0x1b4] sm:$0xf]
      %v407 = vld [vmem:[#allocation3 + $0x1b8] sm:$0xf]
      %v408 = vld [vmem:[#allocation3 + $0x1bc] sm:$0xf]
      %v409 = vld [vmem:[#allocation3 + $0x1c0] sm:$0xf]
      %v410 = vld [vmem:[#allocation3 + $0x1c4] sm:$0xf]
      %v411 = vld [vmem:[#allocation3 + $0x1c8] sm:$0xf]
      %v412 = vld [vmem:[#allocation3 + $0x1cc] sm:$0xf]
      %v413 = vld [vmem:[#allocation3 + $0x1d0] sm:$0xf]
      %v414 = vld [vmem:[#allocation3 + $0x1d4] sm:$0xf]
      %v415 = vld [vmem:[#allocation3 + $0x1d8] sm:$0xf]
      %v416 = vld [vmem:[#allocation3 + $0x1dc] sm:$0xf]
      %v417 = vld [vmem:[#allocation3 + $0x1e0] sm:$0xf]
      %v418 = vld [vmem:[#allocation3 + $0x1e4] sm:$0xf]
      %v419 = vld [vmem:[#allocation3 + $0x1e8] sm:$0xf]
      %v420 = vld [vmem:[#allocation3 + $0x1ec] sm:$0xf]
      %v421 = vld [vmem:[#allocation3 + $0x1f0] sm:$0xf]
      %v422 = vld [vmem:[#allocation3 + $0x1f4] sm:$0xf]
      %v423 = vld [vmem:[#allocation3 + $0x1f8] sm:$0xf]
      %v424 = vld [vmem:[#allocation3 + $0x1fc] sm:$0xf]
      %v425 = vld [vmem:[%s4] sm:$0x1]
      %v427 = vperm.slane %v425, 0
      %v557 = vunpack.c.l.b16 %v297
      %v558 = vunpack.c.l.b16 %v298
      %v559 = vunpack.c.l.b16 %v299
      %v560 = vunpack.c.l.b16 %v300
      %v561 = vunpack.c.l.b16 %v301
      %v562 = vunpack.c.l.b16 %v302
      %v563 = vunpack.c.l.b16 %v303
      %v564 = vunpack.c.l.b16 %v304
      %v565 = vunpack.c.l.b16 %v305
      %v566 = vunpack.c.l.b16 %v306
      %v567 = vunpack.c.l.b16 %v307
      %v568 = vunpack.c.l.b16 %v308
      %v569 = vunpack.c.l.b16 %v309
      %v570 = vunpack.c.l.b16 %v310
      %v571 = vunpack.c.l.b16 %v311
      %v572 = vunpack.c.l.b16 %v312
      %v573 = vunpack.c.l.b16 %v313
      %v574 = vunpack.c.l.b16 %v314
      %v575 = vunpack.c.l.b16 %v315
      %v576 = vunpack.c.l.b16 %v316
      %v577 = vunpack.c.l.b16 %v317
      %v578 = vunpack.c.l.b16 %v318
      %v579 = vunpack.c.l.b16 %v319
      %v580 = vunpack.c.l.b16 %v320
      %v581 = vunpack.c.l.b16 %v321
      %v582 = vunpack.c.l.b16 %v322
      %v583 = vunpack.c.l.b16 %v323
      %v584 = vunpack.c.l.b16 %v324
      %v585 = vunpack.c.l.b16 %v325
      %v586 = vunpack.c.l.b16 %v326
      %v587 = vunpack.c.l.b16 %v327
      %v588 = vunpack.c.l.b16 %v328
      %v589 = vunpack.c.l.b16 %v329
      %v590 = vunpack.c.l.b16 %v330
      %v591 = vunpack.c.l.b16 %v331
      %v592 = vunpack.c.l.b16 %v332
      %v593 = vunpack.c.l.b16 %v333
      %v594 = vunpack.c.l.b16 %v334
      %v595 = vunpack.c.l.b16 %v335
      %v596 = vunpack.c.l.b16 %v336
      %v597 = vunpack.c.l.b16 %v337
      %v598 = vunpack.c.l.b16 %v338
      %v599 = vunpack.c.l.b16 %v339
      %v600 = vunpack.c.l.b16 %v340
      %v601 = vunpack.c.l.b16 %v341
      %v602 = vunpack.c.l.b16 %v342
      %v603 = vunpack.c.l.b16 %v343
      %v604 = vunpack.c.l.b16 %v344
      %v605 = vunpack.c.l.b16 %v345
      %v606 = vunpack.c.l.b16 %v346
      %v607 = vunpack.c.l.b16 %v347
      %v608 = vunpack.c.l.b16 %v348
      %v609 = vunpack.c.l.b16 %v349
      %v610 = vunpack.c.l.b16 %v350
      %v611 = vunpack.c.l.b16 %v351
      %v612 = vunpack.c.l.b16 %v352
      %v613 = vunpack.c.l.b16 %v353
      %v614 = vunpack.c.l.b16 %v354
      %v615 = vunpack.c.l.b16 %v355
      %v616 = vunpack.c.l.b16 %v356
      %v617 = vunpack.c.l.b16 %v357
      %v618 = vunpack.c.l.b16 %v358
      %v619 = vunpack.c.l.b16 %v359
      %v620 = vunpack.c.l.b16 %v360
      %v621 = vunpack.c.l.b16 %v361
      %v622 = vunpack.c.l.b16 %v362
      %v623 = vunpack.c.l.b16 %v363
      %v624 = vunpack.c.l.b16 %v364
      %v625 = vunpack.c.l.b16 %v365
      %v626 = vunpack.c.l.b16 %v366
      %v627 = vunpack.c.l.b16 %v367
      %v628 = vunpack.c.l.b16 %v368
      %v629 = vunpack.c.l.b16 %v369
      %v630 = vunpack.c.l.b16 %v370
      %v631 = vunpack.c.l.b16 %v371
      %v632 = vunpack.c.l.b16 %v372
      %v633 = vunpack.c.l.b16 %v373
      %v634 = vunpack.c.l.b16 %v374
      %v635 = vunpack.c.l.b16 %v375
      %v636 = vunpack.c.l.b16 %v376
      %v637 = vunpack.c.l.b16 %v377
      %v638 = vunpack.c.l.b16 %v378
      %v639 = vunpack.c.l.b16 %v379
      %v640 = vunpack.c.l.b16 %v380
      %v641 = vunpack.c.l.b16 %v381
      %v642 = vunpack.c.l.b16 %v382
      %v643 = vunpack.c.l.b16 %v383
      %v644 = vunpack.c.l.b16 %v384
      %v645 = vunpack.c.l.b16 %v385
      %v646 = vunpack.c.l.b16 %v386
      %v647 = vunpack.c.l.b16 %v387
      %v648 = vunpack.c.l.b16 %v388
      %v649 = vunpack.c.l.b16 %v389
      %v650 = vunpack.c.l.b16 %v390
      %v651 = vunpack.c.l.b16 %v391
      %v652 = vunpack.c.l.b16 %v392
      %v653 = vunpack.c.l.b16 %v393
      %v654 = vunpack.c.l.b16 %v394
      %v655 = vunpack.c.l.b16 %v395
      %v656 = vunpack.c.l.b16 %v396
      %v657 = vunpack.c.l.b16 %v397
      %v658 = vunpack.c.l.b16 %v398
      %v659 = vunpack.c.l.b16 %v399
      %v660 = vunpack.c.l.b16 %v400
      %v661 = vunpack.c.l.b16 %v401
      %v662 = vunpack.c.l.b16 %v402
      %v663 = vunpack.c.l.b16 %v403
      %v664 = vunpack.c.l.b16 %v404
      %v665 = vunpack.c.l.b16 %v405
      %v666 = vunpack.c.l.b16 %v406
      %v667 = vunpack.c.l.b16 %v407
      %v668 = vunpack.c.l.b16 %v408
      %v669 = vunpack.c.l.b16 %v409
      %v670 = vunpack.c.l.b16 %v410
      %v671 = vunpack.c.l.b16 %v411
      %v672 = vunpack.c.l.b16 %v412
      %v673 = vunpack.c.l.b16 %v413
      %v674 = vunpack.c.l.b16 %v414
      %v675 = vunpack.c.l.b16 %v415
      %v676 = vunpack.c.l.b16 %v416
      %v677 = vunpack.c.l.b16 %v417
      %v678 = vunpack.c.l.b16 %v418
      %v679 = vunpack.c.l.b16 %v419
      %v680 = vunpack.c.l.b16 %v420
      %v681 = vunpack.c.l.b16 %v421
      %v682 = vunpack.c.l.b16 %v422
      %v683 = vunpack.c.l.b16 %v423
      %v684 = vunpack.c.l.b16 %v424
      %v685 = vpack.c.b16 %v558, %v557
      %v686 = vpack.c.b16 %v560, %v559
      %v687 = vpack.c.b16 %v562, %v561
      %v688 = vpack.c.b16 %v564, %v563
      %v689 = vpack.c.b16 %v566, %v565
      %v690 = vpack.c.b16 %v568, %v567
      %v691 = vpack.c.b16 %v570, %v569
      %v692 = vpack.c.b16 %v572, %v571
      %v693 = vpack.c.b16 %v574, %v573
      %v694 = vpack.c.b16 %v576, %v575
      %v695 = vpack.c.b16 %v578, %v577
      %v696 = vpack.c.b16 %v580, %v579
      %v697 = vpack.c.b16 %v582, %v581
      %v698 = vpack.c.b16 %v584, %v583
      %v699 = vpack.c.b16 %v586, %v585
      %v700 = vpack.c.b16 %v588, %v587
      %v701 = vpack.c.b16 %v590, %v589
      %v702 = vpack.c.b16 %v592, %v591
      %v703 = vpack.c.b16 %v594, %v593
      %v704 = vpack.c.b16 %v596, %v595
      %v705 = vpack.c.b16 %v598, %v597
      %v706 = vpack.c.b16 %v600, %v599
      %v707 = vpack.c.b16 %v602, %v601
      %v708 = vpack.c.b16 %v604, %v603
      %v709 = vpack.c.b16 %v606, %v605
      %v710 = vpack.c.b16 %v608, %v607
      %v711 = vpack.c.b16 %v610, %v609
      %v712 = vpack.c.b16 %v612, %v611
      %v713 = vpack.c.b16 %v614, %v613
      %v714 = vpack.c.b16 %v616, %v615
      %v715 = vpack.c.b16 %v618, %v617
      %v716 = vpack.c.b16 %v620, %v619
      %v717 = vpack.c.b16 %v622, %v621
      %v718 = vpack.c.b16 %v624, %v623
      %v719 = vpack.c.b16 %v626, %v625
      %v720 = vpack.c.b16 %v628, %v627
      %v721 = vpack.c.b16 %v630, %v629
      %v722 = vpack.c.b16 %v632, %v631
      %v723 = vpack.c.b16 %v634, %v633
      %v724 = vpack.c.b16 %v636, %v635
      %v725 = vpack.c.b16 %v638, %v637
      %v726 = vpack.c.b16 %v640, %v639
      %v727 = vpack.c.b16 %v642, %v641
      %v728 = vpack.c.b16 %v644, %v643
      %v729 = vpack.c.b16 %v646, %v645
      %v730 = vpack.c.b16 %v648, %v647
      %v731 = vpack.c.b16 %v650, %v649
      %v732 = vpack.c.b16 %v652, %v651
      %v733 = vpack.c.b16 %v654, %v653
      %v734 = vpack.c.b16 %v656, %v655
      %v735 = vpack.c.b16 %v658, %v657
      %v736 = vpack.c.b16 %v660, %v659
      %v737 = vpack.c.b16 %v662, %v661
      %v738 = vpack.c.b16 %v664, %v663
      %v739 = vpack.c.b16 %v666, %v665
      %v740 = vpack.c.b16 %v668, %v667
      %v741 = vpack.c.b16 %v670, %v669
      %v742 = vpack.c.b16 %v672, %v671
      %v743 = vpack.c.b16 %v674, %v673
      %v744 = vpack.c.b16 %v676, %v675
      %v745 = vpack.c.b16 %v678, %v677
      %v746 = vpack.c.b16 %v680, %v679
      %v747 = vpack.c.b16 %v682, %v681
      %v748 = vpack.c.b16 %v684, %v683
      %813 = vmatpush.bf16.msra.mxu0 %v692
      %814 = vmatpush.bf16.msra.mxu0 %v691
      %815 = vmatpush.bf16.msra.mxu0 %v690
      %816 = vmatpush.bf16.msra.mxu0 %v689
      %817 = vmatpush.bf16.msra.mxu0 %v688
      %818 = vmatpush.bf16.msra.mxu0 %v687
      %819 = vmatpush.bf16.msra.mxu0 %v686
      %820 = vmatpush.bf16.msra.mxu0 %v685
      %821 = vmatmul.bf16.gmra.mxu0 %v289
      %v822 = vpop.f32.mrf.mxu0
      %v823 = vadd.f32 %v427, %v822
      %v824 = vpop.f32.mrf.mxu0
      %825 = vdwg.mxu0
      %826 = vmatpush.bf16.msra.mxu0 %v700
      %827 = vmatpush.bf16.msra.mxu0 %v699
      %828 = vmatpush.bf16.msra.mxu0 %v698
      %829 = vmatpush.bf16.msra.mxu0 %v697
      %830 = vmatpush.bf16.msra.mxu0 %v696
      %831 = vmatpush.bf16.msra.mxu0 %v695
      %832 = vmatpush.bf16.msra.mxu0 %v694
      %833 = vmatpush.bf16.msra.mxu0 %v693
      %834 = vmatmul.bf16.gmra.mxu0 %v290
      %v835 = vpop.f32.mrf.mxu0
      %v836 = vadd.f32 %v823, %v835
      %v837 = vpop.f32.mrf.mxu0
      %838 = vdwg.mxu0
      %839 = vmatpush.bf16.msra.mxu0 %v708
      %840 = vmatpush.bf16.msra.mxu0 %v707
      %841 = vmatpush.bf16.msra.mxu0 %v706
      %842 = vmatpush.bf16.msra.mxu0 %v705
      %843 = vmatpush.bf16.msra.mxu0 %v704
      %844 = vmatpush.bf16.msra.mxu0 %v703
      %845 = vmatpush.bf16.msra.mxu0 %v702
      %846 = vmatpush.bf16.msra.mxu0 %v701
      %847 = vmatmul.bf16.gmra.mxu0 %v291
      %v848 = vpop.f32.mrf.mxu0
      %v849 = vadd.f32 %v836, %v848
      %v850 = vpop.f32.mrf.mxu0
      %851 = vdwg.mxu0
      %852 = vmatpush.bf16.msra.mxu0 %v716
      %853 = vmatpush.bf16.msra.mxu0 %v715
      %854 = vmatpush.bf16.msra.mxu0 %v714
      %855 = vmatpush.bf16.msra.mxu0 %v713
      %856 = vmatpush.bf16.msra.mxu0 %v712
      %857 = vmatpush.bf16.msra.mxu0 %v711
      %858 = vmatpush.bf16.msra.mxu0 %v710
      %859 = vmatpush.bf16.msra.mxu0 %v709
      %860 = vmatmul.bf16.gmra.mxu0 %v292
      %v861 = vpop.f32.mrf.mxu0
      %v862 = vadd.f32 %v849, %v861
      %v863 = vpop.f32.mrf.mxu0
      %864 = vdwg.mxu0
      %865 = vmatpush.bf16.msra.mxu0 %v724
      %866 = vmatpush.bf16.msra.mxu0 %v723
      %867 = vmatpush.bf16.msra.mxu0 %v722
      %868 = vmatpush.bf16.msra.mxu0 %v721
      %869 = vmatpush.bf16.msra.mxu0 %v720
      %870 = vmatpush.bf16.msra.mxu0 %v719
      %871 = vmatpush.bf16.msra.mxu0 %v718
      %872 = vmatpush.bf16.msra.mxu0 %v717
      %873 = vmatmul.bf16.gmra.mxu0 %v293
      %v874 = vpop.f32.mrf.mxu0
      %v875 = vadd.f32 %v862, %v874
      %v876 = vpop.f32.mrf.mxu0
      %877 = vdwg.mxu0
      %878 = vmatpush.bf16.msra.mxu0 %v732
      %879 = vmatpush.bf16.msra.mxu0 %v731
      %880 = vmatpush.bf16.msra.mxu0 %v730
      %881 = vmatpush.bf16.msra.mxu0 %v729
      %882 = vmatpush.bf16.msra.mxu0 %v728
      %883 = vmatpush.bf16.msra.mxu0 %v727
      %884 = vmatpush.bf16.msra.mxu0 %v726
      %885 = vmatpush.bf16.msra.mxu0 %v725
      %886 = vmatmul.bf16.gmra.mxu0 %v294
      %v887 = vpop.f32.mrf.mxu0
      %v888 = vadd.f32 %v875, %v887
      %v889 = vpop.f32.mrf.mxu0
      %890 = vdwg.mxu0
      %891 = vmatpush.bf16.msra.mxu0 %v740
      %892 = vmatpush.bf16.msra.mxu0 %v739
      %893 = vmatpush.bf16.msra.mxu0 %v738
      %894 = vmatpush.bf16.msra.mxu0 %v737
      %895 = vmatpush.bf16.msra.mxu0 %v736
      %896 = vmatpush.bf16.msra.mxu0 %v735
      %897 = vmatpush.bf16.msra.mxu0 %v734
      %898 = vmatpush.bf16.msra.mxu0 %v733
      %899 = vmatmul.bf16.gmra.mxu0 %v295
      %v900 = vpop.f32.mrf.mxu0
      %v901 = vadd.f32 %v888, %v900
      %v902 = vpop.f32.mrf.mxu0
      %903 = vdwg.mxu0
      %904 = vmatpush.bf16.msra.mxu0 %v748
      %905 = vmatpush.bf16.msra.mxu0 %v747
      %906 = vmatpush.bf16.msra.mxu0 %v746
      %907 = vmatpush.bf16.msra.mxu0 %v745
      %908 = vmatpush.bf16.msra.mxu0 %v744
      %909 = vmatpush.bf16.msra.mxu0 %v743
      %910 = vmatpush.bf16.msra.mxu0 %v742
      %911 = vmatpush.bf16.msra.mxu0 %v741
      %912 = vmatmul.bf16.gmra.mxu0 %v296
      %v913 = vpop.f32.mrf.mxu0
      %v914 = vadd.f32 %v901, %v913
      %v915 = vpop.f32.mrf.mxu0
      %916 = vdwg.mxu0
      %vm917 = vcmp.gt.f32.partialorder %v914, 0.0
      %v918 = vmul.f32 %v914, 0.01
      %v919 = vsel %vm917, %v914, %v918
      %v920 = vpack.c.bf16 %v919, %v919
      %v921 = vld [vmem:[#allocation6] sm:$0xf]
      %v922 = vld [vmem:[#allocation6 + $0x4] sm:$0xf]
      %v923 = vld [vmem:[#allocation6 + $0x8] sm:$0xf]
      %v924 = vld [vmem:[#allocation6 + $0xc] sm:$0xf]
      %v925 = vld [vmem:[#allocation6 + $0x10] sm:$0xf]
      %v926 = vld [vmem:[#allocation6 + $0x14] sm:$0xf]
      %v927 = vld [vmem:[#allocation6 + $0x18] sm:$0xf]
      %v928 = vld [vmem:[#allocation6 + $0x1c] sm:$0xf]
      %v929 = vld [vmem:[#allocation6 + $0x20] sm:$0xf]
      %v930 = vld [vmem:[#allocation6 + $0x24] sm:$0xf]
      %v931 = vld [vmem:[#allocation6 + $0x28] sm:$0xf]
      %v932 = vld [vmem:[#allocation6 + $0x2c] sm:$0xf]
      %v933 = vld [vmem:[#allocation6 + $0x30] sm:$0xf]
      %v934 = vld [vmem:[#allocation6 + $0x34] sm:$0xf]
      %v935 = vld [vmem:[#allocation6 + $0x38] sm:$0xf]
      %v936 = vld [vmem:[#allocation6 + $0x3c] sm:$0xf]
      %v937 = vld [vmem:[%s6] sm:$0x1]
      %v939 = vperm.slane %v937, 0
      %v957 = vunpack.c.l.b16 %v921
      %v958 = vunpack.c.l.b16 %v922
      %v959 = vunpack.c.l.b16 %v923
      %v960 = vunpack.c.l.b16 %v924
      %v961 = vunpack.c.l.b16 %v925
      %v962 = vunpack.c.l.b16 %v926
      %v963 = vunpack.c.l.b16 %v927
      %v964 = vunpack.c.l.b16 %v928
      %v965 = vunpack.c.l.b16 %v929
      %v966 = vunpack.c.l.b16 %v930
      %v967 = vunpack.c.l.b16 %v931
      %v968 = vunpack.c.l.b16 %v932
      %v969 = vunpack.c.l.b16 %v933
      %v970 = vunpack.c.l.b16 %v934
      %v971 = vunpack.c.l.b16 %v935
      %v972 = vunpack.c.l.b16 %v936
      %v973 = vpack.c.b16 %v958, %v957
      %v974 = vpack.c.b16 %v960, %v959
      %v975 = vpack.c.b16 %v962, %v961
      %v976 = vpack.c.b16 %v964, %v963
      %v977 = vpack.c.b16 %v966, %v965
      %v978 = vpack.c.b16 %v968, %v967
      %v979 = vpack.c.b16 %v970, %v969
      %v980 = vpack.c.b16 %v972, %v971
      %989 = vmatpush.bf16.msra.mxu0 %v980
      %990 = vmatpush.bf16.msra.mxu0 %v979
      %991 = vmatpush.bf16.msra.mxu0 %v978
      %992 = vmatpush.bf16.msra.mxu0 %v977
      %993 = vmatpush.bf16.msra.mxu0 %v976
      %994 = vmatpush.bf16.msra.mxu0 %v975
      %995 = vmatpush.bf16.msra.mxu0 %v974
      %996 = vmatpush.bf16.msra.mxu0 %v973
      %997 = vmatmul.bf16.gmra.mxu0 %v920
      %v998 = vpop.f32.mrf.mxu0
      %v999 = vadd.f32 %v939, %v998
      %v1000 = vpop.f32.mrf.mxu0
      %1001 = vdwg.mxu0
      %vm1002 = vcmp.gt.f32.partialorder %v999, 0.0
      %v1003 = vmul.f32 %v999, 0.01
      %v1004 = vsel %vm1002, %v999, %v1003
      %v1005 = vpack.c.bf16 %v1004, %v1004
      %v1006 = vld [vmem:[#allocation8] sm:$0xf]
      %v1007 = vld [vmem:[#allocation8 + $0x4] sm:$0xf]
      %v1008 = vld [vmem:[#allocation8 + $0x8] sm:$0xf]
      %v1009 = vld [vmem:[#allocation8 + $0xc] sm:$0xf]
      %v1010 = vld [vmem:[#allocation8 + $0x10] sm:$0xf]
      %v1011 = vld [vmem:[#allocation8 + $0x14] sm:$0xf]
      %v1012 = vld [vmem:[#allocation8 + $0x18] sm:$0xf]
      %v1013 = vld [vmem:[#allocation8 + $0x1c] sm:$0xf]
      %v1014 = vld [vmem:[#allocation8 + $0x20] sm:$0xf]
      %v1015 = vld [vmem:[#allocation8 + $0x24] sm:$0xf]
      %v1016 = vld [vmem:[#allocation8 + $0x28] sm:$0xf]
      %v1017 = vld [vmem:[#allocation8 + $0x2c] sm:$0xf]
      %v1018 = vld [vmem:[#allocation8 + $0x30] sm:$0xf]
      %v1019 = vld [vmem:[#allocation8 + $0x34] sm:$0xf]
      %v1020 = vld [vmem:[#allocation8 + $0x38] sm:$0xf]
      %v1021 = vld [vmem:[#allocation8 + $0x3c] sm:$0xf]
      %v1022 = vld [vmem:[%s8] sm:$0x1]
      %v1024 = vperm.slane %v1022, 0
      %v1042 = vunpack.c.l.b16 %v1006
      %v1043 = vunpack.c.l.b16 %v1007
      %v1044 = vunpack.c.l.b16 %v1008
      %v1045 = vunpack.c.l.b16 %v1009
      %v1046 = vunpack.c.l.b16 %v1010
      %v1047 = vunpack.c.l.b16 %v1011
      %v1048 = vunpack.c.l.b16 %v1012
      %v1049 = vunpack.c.l.b16 %v1013
      %v1050 = vunpack.c.l.b16 %v1014
      %v1051 = vunpack.c.l.b16 %v1015
      %v1052 = vunpack.c.l.b16 %v1016
      %v1053 = vunpack.c.l.b16 %v1017
      %v1054 = vunpack.c.l.b16 %v1018
      %v1055 = vunpack.c.l.b16 %v1019
      %v1056 = vunpack.c.l.b16 %v1020
      %v1057 = vunpack.c.l.b16 %v1021
      %v1058 = vpack.c.b16 %v1043, %v1042
      %v1059 = vpack.c.b16 %v1045, %v1044
      %v1060 = vpack.c.b16 %v1047, %v1046
      %v1061 = vpack.c.b16 %v1049, %v1048
      %v1062 = vpack.c.b16 %v1051, %v1050
      %v1063 = vpack.c.b16 %v1053, %v1052
      %v1064 = vpack.c.b16 %v1055, %v1054
      %v1065 = vpack.c.b16 %v1057, %v1056
      %1074 = vmatpush.bf16.msra.mxu0 %v1065
      %1075 = vmatpush.bf16.msra.mxu0 %v1064
      %1076 = vmatpush.bf16.msra.mxu0 %v1063
      %1077 = vmatpush.bf16.msra.mxu0 %v1062
      %1078 = vmatpush.bf16.msra.mxu0 %v1061
      %1079 = vmatpush.bf16.msra.mxu0 %v1060
      %1080 = vmatpush.bf16.msra.mxu0 %v1059
      %1081 = vmatpush.bf16.msra.mxu0 %v1058
      %1082 = vmatmul.bf16.gmra.mxu0 %v1005
      %v1083 = vpop.f32.mrf.mxu0
      %v1084 = vadd.f32 %v1024, %v1083
      %v1085 = vpop.f32.mrf.mxu0
      %1086 = vdwg.mxu0
      %vm1087 = vcmp.gt.f32.partialorder %v1084, 0.0
      %v1088 = vmul.f32 %v1084, 0.01
      %v1089 = vsel %vm1087, %v1084, %v1088
      %v1090 = vxor.u32 %v1089, 2147483648
      %v1091 = vmul.f32 %v1090, 1.442695
      %v1092 = vpow.pop %v1091
      %v1093 = vadd.f32 %v1092, 1.0
      %v1094 = vrcp.pop %v1093
      %v1095 = vmul.f32 %v1093, %v1094
      %v1096 = vsub.f32 1.0, %v1095
      %v1097 = vmul.f32 %v1094, %v1096
      %v1098 = vadd.f32 %v1094, %v1097
      %vm1099 = vweird.f32 %v1093
      %vm1100 = vweird.f32 %v1094
      %vm1101 = vmor %vm1099, %vm1100
      %v1102 = vsel %vm1101, %v1094, %v1098
      %v1103 = vand.u32 2147483647, %v1093
      %vm1104 = vcmp.eq.f32.partialorder %v1103, 8.507059e+37
      %v1105 = vand.u32 %v1093, 2147483648
      %v1106 = vor.u32 1.1754944e-38, %v1105
      %v1107 = vsel %vm1104, %v1106, %v1102
      %v1108 = vmul.f32 1.0, %v1107
      %1109 = vst [vmem:[#allocation9] sm:$0x3] %v1108
    $region57: #{tpu_custom_call.1} parent=1 // pred_fallthru
      _
    // Predicated region
    $region58: #{tpu_custom_call.1} parent=1 // pred_check
      _
    $region59: #{tpu_custom_call.1} parent=1 // pred_check_branch
      %1111 = sbr.rel (0) target = $region61
    $region60: #{tpu_custom_call.1} parent=1 // pred_region
      %1113 = vsyncadd [#allocation5], 0
      %s1115 = sshll.u32 [#allocation9], 4
      %s1116 = int_to_ptr.vmem [resolvable:$true] %s1115
      %s1117 = sshll.u32 %s9, 4
      %s1118 = int_to_ptr.hbm [resolvable:$true] %s1117
      %1120 = dma.vmem_to_hbm [thread:$0]  %s1116, 32, %s1118, [#allocation5]
    $region61: #{tpu_custom_call.1} parent=1 // pred_fallthru
      _
    // Predicated region
    $region62: #{tpu_custom_call.1} parent=1 // pred_check
      _
    $region63: #{tpu_custom_call.1} parent=1 // pred_check_branch
      %1122 = sbr.rel (0) target = $region65
    $region64: #{tpu_custom_call.1} parent=1 // pred_region
      %1124 = dma.done [#allocation5], 32
    $region65: #{tpu_custom_call.1} parent=1 // pred_fallthru
      _
    %1125 = vsyncpa [#allocation4], 1
    %1126 = vsyncpa [#allocation7], 1
    %1127 = vsyncpa [#allocation5], 1

</llo_original>
